<compile_context>
chip_gen: v7x
topology: tpu7x:2x2x1
jax: 0.10.0
libtpu: 0.0.40
codegen_flags: <defaults>
</compile_context>

<pallas_src>
import functools

import jax
import jax.numpy as jnp
from jax.experimental import pallas as pl
from jax.experimental.pallas import tpu as pltpu

LEAKY_SLOPE = 0.01  # PyTorch nn.LeakyReLU() default negative_slope


def _make_gen_block_kernel(S, Cin, Cout, compute_dtype):
    """Kernel for one batch element: two fused 3x3 convs + bias + LeakyReLU."""
    Wp = S + 2            # padded row stride
    L = S * Wp            # per-conv over-computed output length (2 junk cols/row)
    PF = (S + 3) * Wp     # flat padded image length (+1 slack row)
    C3 = 3 * Cout

    def kernel(p1_ref, w1_ref, b1_ref, w2_ref, b2_ref, o_ref, z_ref):
        # p1_ref : (1, 9*Cin, L)  stage-1 im2col patches (built in the wrapper)
        # w*_ref : (Cout, 9*C)    weight slabs, rows ordered (dy, dx, c)
        # b*_ref : (Cout, 1)
        # o_ref  : (1, Cout, L)   over-computed (row stride S+2) conv2 output
        # z_ref  : (3*Cout, PF)   f32 scratch: 3 dx-shifted copies of the padded
        #                         intermediate image (shared-shift im2col)

        def bias_lrelu(acc, b_ref):
            acc = acc + b_ref[...].astype(jnp.float32)
            return jnp.where(acc > 0, acc, LEAKY_SLOPE * acc)

        # ---- stage 1: one MXU matmul, K = 9*Cin (im2col hoisted to wrapper) --
        h = jnp.dot(w1_ref[...], p1_ref[0],
                    preferred_element_type=jnp.float32)              # (Cout, L)
        h = bias_lrelu(h, b1_ref)

        # Zero the 2 over-computed junk columns of every row (they land in
        # conv2's zero halo).  Mask built from an in-kernel iota -> no captured
        # array constants.
        col = jax.lax.broadcasted_iota(jnp.int32, (1, L), 1) % Wp
        h = jnp.where(col < S, h, 0.0)

        # ---- stage 2: halo + shared-shift im2col, all in VMEM ---------------
        # Invariant: z_ref[dx*Cout + c, q] == padded_intermediate[c, q + dx].
        # Only the head [0, Wp+1) and tail [Wp-1+L, 2*Wp+L) of the read window
        # are read without being overwritten below, so only those are re-zeroed
        # each step (everything else the taps read is stored just after).
        z_ref[:, 0:Wp + 1] = jnp.zeros((C3, Wp + 1), jnp.float32)
        z_ref[:, Wp - 1 + L:2 * Wp + L] = jnp.zeros((C3, Wp + 1), jnp.float32)
        for dx in range(3):
            z_ref[dx * Cout:(dx + 1) * Cout,
                  Wp + 1 - dx:Wp + 1 - dx + L] = h

        # 3 per-dy slices give the (dy, dx, c)-ordered 9*Cout patch rows
        # (Cout=8 -> each 3*Cout piece is 8-sublane aligned).
        patches2 = jnp.concatenate(
            [z_ref[:, dy * Wp: dy * Wp + L] for dy in range(3)], axis=0)
        y = jnp.dot(w2_ref[...], patches2.astype(compute_dtype),
                    preferred_element_type=jnp.float32)              # (Cout, L)
        y = bias_lrelu(y, b2_ref)

        # Lane-dense store of the over-computed result; junk columns are
        # stripped by a cheap slice in the XLA wrapper.
        o_ref[...] = y[None].astype(o_ref.dtype)

    return kernel


def generator_block(x_nchw, params, size, compute_dtype=jnp.float32):
    """GeneratorBlock forward. x_nchw: (N, Cin, H, W) -> (N, Cout, size, size)."""
    N, Cin, H, W = x_nchw.shape
    Cout = params["w1"].shape[-1]
    S = size
    Wp = S + 2
    L = S * Wp
    PF = (S + 3) * Wp   # +1 slack row so all tap slices stay in-bounds

    # Fused nearest-neighbour upsample + 1px zero halo, built by one gather on
    # the tiny pre-upsample tensor.  src = floor(dst*in/out) matches
    # nn.UpsamplingNearest2d.
    rows = (jnp.arange(S) * H) // S
    cols = (jnp.arange(S) * W) // S
    xp = jnp.pad(x_nchw, ((0, 0), (0, 0), (1, 2), (1, 1)))
    row_idx = jnp.concatenate([jnp.zeros((1,), jnp.int32),
                               (rows + 1).astype(jnp.int32),
                               jnp.array([H + 1, H + 2], jnp.int32)])  # (S+3,)
    col_idx = jnp.concatenate([jnp.zeros((1,), jnp.int32),
                               (cols + 1).astype(jnp.int32),
                               jnp.array([W + 1], jnp.int32)])         # (S+2,)
    x_up = xp[:, :, row_idx][:, :, :, col_idx]          # (N, Cin, S+3, S+2)
    x_flat = x_up.reshape(N, Cin, PF)

    # Stage-1 im2col hoisted out of the kernel: every 3x3 tap is a contiguous
    # slice of the row-flattened padded image -> one (N, 9*Cin, L) patch slab.
    taps = [x_flat[:, :, dy * Wp + dx: dy * Wp + dx + L]
            for dy in range(3) for dx in range(3)]
    x_patches = jnp.concatenate(taps, axis=1).astype(compute_dtype)   # (N, 9Cin, L)

    # Weight slabs (Cout, 9*C), rows ordered (dy, dx, c) to match the patches.
    w1 = jnp.transpose(params["w1"], (3, 0, 1, 2)).reshape(Cout, 9 * Cin)
    w2 = jnp.transpose(params["w2"], (3, 0, 1, 2)).reshape(Cout, 9 * Cout)
    w1 = w1.astype(compute_dtype)
    w2 = w2.astype(compute_dtype)
    b1 = params["b1"].reshape(Cout, 1).astype(jnp.float32)
    b2 = params["b2"].reshape(Cout, 1).astype(jnp.float32)

    # Derive the VMEM budget from actual buffer sizes (double-buffered in/out
    # blocks + scratch) instead of a fixed constant.
    cd = jnp.dtype(compute_dtype).itemsize
    od = jnp.dtype(x_nchw.dtype).itemsize
    buf_bytes = (9 * Cin * L + Cout * 9 * Cin + Cout * 9 * Cout) * cd \
                + 2 * Cout * 4 + Cout * L * od
    scratch_bytes = 3 * Cout * PF * 4
    vmem_limit = int(min(128 << 20,
                         max(16 << 20, 2 * buf_bytes + scratch_bytes + (2 << 20))))

    out_flat = pl.pallas_call(
        _make_gen_block_kernel(S, Cin, Cout, compute_dtype),
        out_shape=jax.ShapeDtypeStruct((N, Cout, L), x_nchw.dtype),
        grid=(N,),
        in_specs=[
            pl.BlockSpec((1, 9 * Cin, L), lambda n: (n, 0, 0)),
            pl.BlockSpec((Cout, 9 * Cin), lambda n: (0, 0)),
            pl.BlockSpec((Cout, 1), lambda n: (0, 0)),
            pl.BlockSpec((Cout, 9 * Cout), lambda n: (0, 0)),
            pl.BlockSpec((Cout, 1), lambda n: (0, 0)),
        ],
        out_specs=pl.BlockSpec((1, Cout, L), lambda n: (n, 0, 0)),
        scratch_shapes=[pltpu.VMEM((3 * Cout, PF), jnp.float32)],
        compiler_params=pltpu.CompilerParams(
            dimension_semantics=("parallel",),
            vmem_limit_bytes=vmem_limit),
    )(x_patches, w1, b1, w2, b2)

    # (N, Cout, S*(S+2)) -> strip the 2 over-computed columns per row.
    return out_flat.reshape(N, Cout, S, Wp)[:, :, :, :S]


def init_params(key, in_ch, out_ch):
    """Deterministic init; weights stored HWIO: (kh, kw, Cin, Cout)."""
    k1, k2, k3, k4 = jax.random.split(key, 4)
    bound1 = 1.0 / jnp.sqrt(in_ch * 9.0)
    bound2 = 1.0 / jnp.sqrt(out_ch * 9.0)
    return {
        "w1": jax.random.uniform(k1, (3, 3, in_ch, out_ch), jnp.float32,
                                 -bound1, bound1),
        "b1": jax.random.uniform(k2, (out_ch,), jnp.float32, -bound1, bound1),
        "w2": jax.random.uniform(k3, (3, 3, out_ch, out_ch), jnp.float32,
                                 -bound2, bound2),
        "b2": jax.random.uniform(k4, (out_ch,), jnp.float32, -bound2, bound2),
    }


def _reference_block(x, params, size):
    """Plain-JAX reference (conv_general_dilated), NCHW."""
    _, _, H, W = x.shape
    rows = (jnp.arange(size) * H) // size
    cols = (jnp.arange(size) * W) // size
    x = x[:, :, rows][:, :, :, cols]

    def conv(v, w, b):
        y = jax.lax.conv_general_dilated(
            v, w, window_strides=(1, 1), padding="SAME",
            dimension_numbers=("NCHW", "HWIO", "NCHW"),
            precision=jax.lax.Precision.HIGHEST)
        y = y + b.reshape(1, -1, 1, 1)
        return jnp.where(y > 0, y, LEAKY_SLOPE * y)

    return conv(conv(x, params["w1"], params["b1"]), params["w2"], params["b2"])


if __name__ == "__main__":
    key = jax.random.PRNGKey(0)
    k_x, k_p = jax.random.split(key)

    # GeneratorBlock(size=16, in_ch=4, out_ch=8); input spatial 8x8 (upsamples 2x)
    N, in_ch, out_ch = 2, 4, 8
    H_in = W_in = 8
    size = 16

    x = jax.random.normal(k_x, (N, in_ch, H_in, W_in), jnp.float32)
    params = init_params(k_p, in_ch, out_ch)
    ref = _reference_block(x, params, size)

    # f32 compute path: tight check against the XLA reference.
    fwd_f32 = jax.jit(functools.partial(generator_block, size=size,
                                        compute_dtype=jnp.float32))
    out = jax.block_until_ready(fwd_f32(x, params))
    assert out.shape == (N, out_ch, size, size), out.shape
    assert out.dtype == jnp.float32
    assert jnp.allclose(out, ref, atol=1e-4, rtol=1e-4)

    # bf16 MXU inputs with f32 accumulation + f32 scratch: looser check.
    fwd_bf16 = jax.jit(functools.partial(generator_block, size=size,
                                         compute_dtype=jnp.bfloat16))
    out_bf16 = jax.block_until_ready(fwd_bf16(x, params))
    assert out_bf16.shape == (N, out_ch, size, size)
    assert jnp.allclose(out_bf16, ref, atol=5e-2, rtol=5e-2)

    print("KERNEL_OK")
</pallas_src>

<mosaic_0001>
module attributes {stable_mosaic.version = 11 : i64} {
  func.func @kernel(%arg0: i32, %arg1: memref<1x36x288xf32, #tpu.memory_space<vmem>>, %arg2: memref<8x36xf32, #tpu.memory_space<vmem>>, %arg3: memref<8x1xf32, #tpu.memory_space<vmem>>, %arg4: memref<8x72xf32, #tpu.memory_space<vmem>>, %arg5: memref<8x1xf32, #tpu.memory_space<vmem>>, %arg6: memref<1x8x288xf32, #tpu.memory_space<vmem>>, %arg7: memref<24x342xf32, #tpu.memory_space<vmem>>) attributes {dimension_semantics = [#tpu.dimension_semantics<parallel>], iteration_bounds = array<i64: 2>, scalar_prefetch = 0 : i64, scratch_operands = 1 : i64, tpu.core_type = #tpu.core_type<tc>, window_params = [{transform_indices = @transform_0, window_bounds = array<i64: 1, 36, 288>}, {pipeline_mode = #tpu.pipeline_mode<synchronous>, transform_indices = @transform_1, window_bounds = array<i64: 8, 36>}, {pipeline_mode = #tpu.pipeline_mode<synchronous>, transform_indices = @transform_2, window_bounds = array<i64: 8, 1>}, {pipeline_mode = #tpu.pipeline_mode<synchronous>, transform_indices = @transform_3, window_bounds = array<i64: 8, 72>}, {pipeline_mode = #tpu.pipeline_mode<synchronous>, transform_indices = @transform_4, window_bounds = array<i64: 8, 1>}, {transform_indices = @transform_5, window_bounds = array<i64: 1, 8, 288>}]} {
    %c0 = arith.constant 0 : index
    %c0_0 = arith.constant 0 : index
    %0 = vector.load %arg2[%c0, %c0_0] : memref<8x36xf32, #tpu.memory_space<vmem>>, vector<8x36xf32>
    %c0_1 = arith.constant 0 : index
    %c0_2 = arith.constant 0 : index
    %c0_3 = arith.constant 0 : index
    %1 = vector.load %arg1[%c0_1, %c0_2, %c0_3] : memref<1x36x288xf32, #tpu.memory_space<vmem>>, vector<1x36x288xf32>
    %2 = vector.shape_cast %1 : vector<1x36x288xf32> to vector<36x288xf32>
    %cst = arith.constant dense<0.000000e+00> : vector<8x288xf32>
    %3 = tpu.matmul %0, %2, %cst {dimension_numbers = #tpu.dot_dimension_numbers<[1], [0], [0], [1], [0, 0, 1, 1], [], []>} : vector<8x36xf32>, vector<36x288xf32>, vector<8x288xf32> -> vector<8x288xf32>
    %c0_4 = arith.constant 0 : index
    %c0_5 = arith.constant 0 : index
    %4 = vector.load %arg3[%c0_4, %c0_5] : memref<8x1xf32, #tpu.memory_space<vmem>>, vector<8x1xf32>
    %5 = vector.broadcast %4 : vector<8x1xf32> to vector<8x288xf32>
    %6 = arith.addf %3, %5 : vector<8x288xf32>
    %cst_6 = arith.constant 0.000000e+00 : f32
    %7 = vector.broadcast %cst_6 : f32 to vector<8x288xf32>
    %8 = arith.cmpf ogt, %6, %7 : vector<8x288xf32>
    %cst_7 = arith.constant 0.00999999977 : f32
    %9 = vector.broadcast %cst_7 : f32 to vector<8x288xf32>
    %10 = arith.mulf %9, %6 : vector<8x288xf32>
    %11 = arith.select %8, %6, %10 : vector<8x288xi1>, vector<8x288xf32>
    %12 = tpu.iota {dimensions = array<i32: 1>} : vector<1x288xi32>
    %c18_i32 = arith.constant 18 : i32
    %c0_i32 = arith.constant 0 : i32
    %13 = arith.cmpi eq, %c18_i32, %c0_i32 : i32
    %c1_i32 = arith.constant 1 : i32
    %14 = arith.select %13, %c1_i32, %c18_i32 : i32
    %15 = vector.broadcast %14 : i32 to vector<1x288xi32>
    %16 = arith.remsi %12, %15 : vector<1x288xi32>
    %c0_i32_8 = arith.constant 0 : i32
    %17 = vector.broadcast %c0_i32_8 : i32 to vector<1x288xi32>
    %18 = arith.cmpi ne, %16, %17 : vector<1x288xi32>
    %c0_i32_9 = arith.constant 0 : i32
    %19 = vector.broadcast %c0_i32_9 : i32 to vector<1x288xi32>
    %20 = arith.cmpi slt, %16, %19 : vector<1x288xi32>
    %c0_i32_10 = arith.constant 0 : i32
    %21 = arith.cmpi slt, %14, %c0_i32_10 : i32
    %22 = vector.broadcast %21 : i1 to vector<1x288xi1>
    %23 = vector.broadcast %22 : vector<1x288xi1> to vector<1x288xi1>
    %24 = arith.xori %20, %23 : vector<1x288xi1>
    %25 = arith.andi %24, %18 : vector<1x288xi1>
    %26 = vector.broadcast %14 : i32 to vector<1x288xi32>
    %27 = arith.addi %16, %26 : vector<1x288xi32>
    %28 = arith.select %25, %27, %16 : vector<1x288xi1>, vector<1x288xi32>
    %c16_i32 = arith.constant 16 : i32
    %29 = vector.broadcast %c16_i32 : i32 to vector<1x288xi32>
    %30 = arith.cmpi slt, %28, %29 : vector<1x288xi32>
    %cst_11 = arith.constant 0.000000e+00 : f32
    %31 = vector.shape_cast %30 : vector<1x288xi1> to vector<1x288xi1>
    %32 = vector.broadcast %31 : vector<1x288xi1> to vector<8x288xi1>
    %33 = vector.broadcast %cst_11 : f32 to vector<8x288xf32>
    %34 = arith.select %32, %11, %33 : vector<8x288xi1>, vector<8x288xf32>
    %cst_12 = arith.constant 0.000000e+00 : f32
    %35 = vector.broadcast %cst_12 : f32 to vector<24x19xf32>
    %c0_13 = arith.constant 0 : index
    %c0_14 = arith.constant 0 : index
    %36 = vector.load %arg7[%c0_13, %c0_14] : memref<24x342xf32, #tpu.memory_space<vmem>>, vector<24x19xf32>
    tpu.vector_store %arg7[%c0_13, %c0_14], %35 {strides = array<i32>} : memref<24x342xf32, #tpu.memory_space<vmem>>, vector<24x19xf32>,
    %cst_15 = arith.constant 0.000000e+00 : f32
    %37 = vector.broadcast %cst_15 : f32 to vector<24x19xf32>
    %c0_16 = arith.constant 0 : index
    %c305 = arith.constant 305 : index
    %38 = vector.load %arg7[%c0_16, %c305] : memref<24x342xf32, #tpu.memory_space<vmem>>, vector<24x19xf32>
    tpu.vector_store %arg7[%c0_16, %c305], %37 {strides = array<i32>} : memref<24x342xf32, #tpu.memory_space<vmem>>, vector<24x19xf32>,
    %c0_17 = arith.constant 0 : index
    %c19 = arith.constant 19 : index
    %39 = vector.load %arg7[%c0_17, %c19] : memref<24x342xf32, #tpu.memory_space<vmem>>, vector<8x288xf32>
    tpu.vector_store %arg7[%c0_17, %c19], %34 {strides = array<i32>} : memref<24x342xf32, #tpu.memory_space<vmem>>, vector<8x288xf32>,
    %c8 = arith.constant 8 : index
    %c18 = arith.constant 18 : index
    %40 = vector.load %arg7[%c8, %c18] : memref<24x342xf32, #tpu.memory_space<vmem>>, vector<8x288xf32>
    tpu.vector_store %arg7[%c8, %c18], %34 {strides = array<i32>} : memref<24x342xf32, #tpu.memory_space<vmem>>, vector<8x288xf32>,
    %c16 = arith.constant 16 : index
    %c17 = arith.constant 17 : index
    %41 = vector.load %arg7[%c16, %c17] : memref<24x342xf32, #tpu.memory_space<vmem>>, vector<8x288xf32>
    tpu.vector_store %arg7[%c16, %c17], %34 {strides = array<i32>} : memref<24x342xf32, #tpu.memory_space<vmem>>, vector<8x288xf32>,
    %c0_18 = arith.constant 0 : index
    %c0_19 = arith.constant 0 : index
    %42 = vector.load %arg7[%c0_18, %c0_19] : memref<24x342xf32, #tpu.memory_space<vmem>>, vector<24x288xf32>
    %c0_20 = arith.constant 0 : index
    %c18_21 = arith.constant 18 : index
    %43 = vector.load %arg7[%c0_20, %c18_21] : memref<24x342xf32, #tpu.memory_space<vmem>>, vector<24x288xf32>
    %c0_22 = arith.constant 0 : index
    %c36 = arith.constant 36 : index
    %44 = vector.load %arg7[%c0_22, %c36] : memref<24x342xf32, #tpu.memory_space<vmem>>, vector<24x288xf32>
    %45 = tpu.concatenate %42, %43, %44 in 0 : vector<24x288xf32>, vector<24x288xf32>, vector<24x288xf32> -> vector<72x288xf32>
    %c0_23 = arith.constant 0 : index
    %c0_24 = arith.constant 0 : index
    %46 = vector.load %arg4[%c0_23, %c0_24] : memref<8x72xf32, #tpu.memory_space<vmem>>, vector<8x72xf32>
    %cst_25 = arith.constant dense<0.000000e+00> : vector<8x288xf32>
    %47 = tpu.matmul %46, %45, %cst_25 {dimension_numbers = #tpu.dot_dimension_numbers<[1], [0], [0], [1], [0, 0, 1, 1], [], []>} : vector<8x72xf32>, vector<72x288xf32>, vector<8x288xf32> -> vector<8x288xf32>
    %c0_26 = arith.constant 0 : index
    %c0_27 = arith.constant 0 : index
    %48 = vector.load %arg5[%c0_26, %c0_27] : memref<8x1xf32, #tpu.memory_space<vmem>>, vector<8x1xf32>
    %49 = vector.broadcast %48 : vector<8x1xf32> to vector<8x288xf32>
    %50 = arith.addf %47, %49 : vector<8x288xf32>
    %cst_28 = arith.constant 0.000000e+00 : f32
    %51 = vector.broadcast %cst_28 : f32 to vector<8x288xf32>
    %52 = arith.cmpf ogt, %50, %51 : vector<8x288xf32>
    %cst_29 = arith.constant 0.00999999977 : f32
    %53 = vector.broadcast %cst_29 : f32 to vector<8x288xf32>
    %54 = arith.mulf %53, %50 : vector<8x288xf32>
    %55 = arith.select %52, %50, %54 : vector<8x288xi1>, vector<8x288xf32>
    %56 = vector.shape_cast %55 : vector<8x288xf32> to vector<1x8x288xf32>
    %c0_30 = arith.constant 0 : index
    %c0_31 = arith.constant 0 : index
    %c0_32 = arith.constant 0 : index
    %57 = vector.load %arg6[%c0_30, %c0_31, %c0_32] : memref<1x8x288xf32, #tpu.memory_space<vmem>>, vector<1x8x288xf32>
    tpu.vector_store %arg6[%c0_30, %c0_31, %c0_32], %56 {strides = array<i32>} : memref<1x8x288xf32, #tpu.memory_space<vmem>>, vector<1x8x288xf32>,
    return
  }
  func.func @transform_0(%arg0: i32) -> (i32, i32, i32) {
    %c0_i32 = arith.constant 0 : i32
    %c0_i32_0 = arith.constant 0 : i32
    %c0_i32_1 = arith.constant 0 : i32
    return %arg0, %c0_i32, %c0_i32_0 : i32, i32, i32
  }
  func.func @transform_1(%arg0: i32) -> (i32, i32) {
    %c0_i32 = arith.constant 0 : i32
    %c0_i32_0 = arith.constant 0 : i32
    %c0_i32_1 = arith.constant 0 : i32
    return %c0_i32, %c0_i32_0 : i32, i32
  }
  func.func @transform_2(%arg0: i32) -> (i32, i32) {
    %c0_i32 = arith.constant 0 : i32
    %c0_i32_0 = arith.constant 0 : i32
    %c0_i32_1 = arith.constant 0 : i32
    return %c0_i32, %c0_i32_0 : i32, i32
  }
  func.func @transform_3(%arg0: i32) -> (i32, i32) {
    %c0_i32 = arith.constant 0 : i32
    %c0_i32_0 = arith.constant 0 : i32
    %c0_i32_1 = arith.constant 0 : i32
    return %c0_i32, %c0_i32_0 : i32, i32
  }
  func.func @transform_4(%arg0: i32) -> (i32, i32) {
    %c0_i32 = arith.constant 0 : i32
    %c0_i32_0 = arith.constant 0 : i32
    %c0_i32_1 = arith.constant 0 : i32
    return %c0_i32, %c0_i32_0 : i32, i32
  }
  func.func @transform_5(%arg0: i32) -> (i32, i32, i32) {
    %c0_i32 = arith.constant 0 : i32
    %c0_i32_0 = arith.constant 0 : i32
    %c0_i32_1 = arith.constant 0 : i32
    return %arg0, %c0_i32, %c0_i32_0 : i32, i32, i32
  }
}

</mosaic_0001>

<llo_original>
// kernel: generator_block.1
$region0: #{generator_block.1}
  #allocation0 [shape = 'u32[]', space=smem, size = 0x4, offset = 0x4, fixed_abs, tag = 'smem constant byte address 0x4 - core index']
  #allocation1 [shape = 'u32[144,128]{1,0:T(1,128)}', space=vmem, size = 0x12000, scoped, tag = 'internal scratch']
  #allocation2 [shape = 'f32[24,342]{1,0:T(8,128)}', space=vmem, size = 0x9000, scoped, tag = 'scratch operand']
  %s0 = inlined_call_operand.vmem [shape: f32[2,36,288], index: 0, kind: input, shape index: {}]
  %s1 = inlined_call_operand.vmem [shape: f32[8,36], index: 1, kind: input, shape index: {}]
  %s2 = inlined_call_operand.vmem [shape: f32[8,1], index: 2, kind: input, shape index: {}]
  %s3 = inlined_call_operand.vmem [shape: f32[8,72], index: 3, kind: input, shape index: {}]
  %s4 = inlined_call_operand.vmem [shape: f32[8,1], index: 4, kind: input, shape index: {}]
  %s5 = inlined_call_operand.vmem [shape: f32[2,8,288], index: 5, kind: output, shape index: {}]
  %s6 = sld [smem:[#allocation0]]
  $region53: #{generator_block.1} parent=0
    _
  %s8 = ssub.s32 1, %s6
  %s9 = scalar_select 0, %s8, %s6
  loop: start=0, step=1, limit=4
  $region2: #{generator_block.1} parent=0 // loop_pre_header
    _
  $region3: #{generator_block.1} parent=0 // loop_header
    %s11 = sphi 0, %s15
    %p12 = scmp.ge.s32.totalorder %s11, 4
    %s21 = sphi 0, %s23
    %s24 = sphi 0, %s21
    %s25 = sphi 0, %s24
    %s41 = sphi 0, %s25
    %s45 = sphi 0, %s45
    %s47 = sphi 0, %s45
    %s48 = sphi 0, %s47
    %s62 = sphi 0, %s48
    %s66 = sphi 0, %s66
    %s68 = sphi 0, %s66
    %s69 = sphi 0, %s68
    %s83 = sphi 0, %s69
    %s87 = sphi 0, %s87
    %s89 = sphi 0, %s87
    %s90 = sphi 0, %s89
    %s104 = sphi 0, %s90
    %s108 = sphi 0, %s108
    %s110 = sphi 0, %s108
    %s111 = sphi 0, %s110
    %s125 = sphi 0, %s111
    %s131 = sphi 0, %s133
    %s134 = sphi 0, %s131
    %s135 = sphi 0, %s134
    %s151 = sphi 0, %s135
  $region4: #{generator_block.1} parent=0 // loop_header_branch
    %14 = sbr.rel (%p12) target = $region8
  $region5: #{generator_block.1} parent=0 // loop_body
    %s16 = ssub.s32 %s11, 1
    %s17 = ssub.s32 %s11, 2
    %s18 = sadd.s32 %s11, 1
    %s19 = ssub.s32 %s11, %s18
    %p20 = scmp.eq.s32.totalorder %s19, 0
    %s22 = sadd.s32 %s21, 1
    %s23 = scalar_select %p20, %s21, %s22
    %p26 = pneg %p20
    %p27 = scmp.eq.s32.totalorder %s11, 1
    %p28 = por %p26, %p27
    %p29 = scmp.ne.s32.totalorder %s21, %s24
    %p30 = scmp.eq.s32.totalorder %s11, 0
    %p31 = por %p29, %p30
    %p32 = scmp.ne.s32.totalorder %s21, %s24
    %p33 = scmp.eq.s32.totalorder %s16, 1
    %p34 = por %p32, %p33
    %p35 = scmp.ne.s32.totalorder %s24, %s25
    %p36 = scmp.eq.s32.totalorder %s16, 0
    %p37 = por %p35, %p36
    %p38 = scmp.ne.s32.totalorder %s24, %s25
    %p39 = scmp.eq.s32.totalorder %s17, 1
    %p40 = por %p38, %p39
    %p42 = scmp.ne.s32.totalorder %s25, %s41
    %p43 = scmp.eq.s32.totalorder %s17, 0
    %p44 = por %p42, %p43
    %s46 = sadd.s32 %s45, 1
    %p49 = scmp.eq.s32.totalorder %s11, 1
    %p50 = scmp.ne.s32.totalorder %s45, %s47
    %p51 = scmp.eq.s32.totalorder %s11, 0
    %p52 = por %p50, %p51
    %p53 = scmp.ne.s32.totalorder %s45, %s47
    %p54 = scmp.eq.s32.totalorder %s16, 1
    %p55 = por %p53, %p54
    %p56 = scmp.ne.s32.totalorder %s47, %s48
    %p57 = scmp.eq.s32.totalorder %s16, 0
    %p58 = por %p56, %p57
    %p59 = scmp.ne.s32.totalorder %s47, %s48
    %p60 = scmp.eq.s32.totalorder %s17, 1
    %p61 = por %p59, %p60
    %p63 = scmp.ne.s32.totalorder %s48, %s62
    %p64 = scmp.eq.s32.totalorder %s17, 0
    %p65 = por %p63, %p64
    %s67 = sadd.s32 %s66, 1
    %p70 = scmp.eq.s32.totalorder %s11, 1
    %p71 = scmp.ne.s32.totalorder %s66, %s68
    %p72 = scmp.eq.s32.totalorder %s11, 0
    %p73 = por %p71, %p72
    %p74 = scmp.ne.s32.totalorder %s66, %s68
    %p75 = scmp.eq.s32.totalorder %s16, 1
    %p76 = por %p74, %p75
    %p77 = scmp.ne.s32.totalorder %s68, %s69
    %p78 = scmp.eq.s32.totalorder %s16, 0
    %p79 = por %p77, %p78
    %p80 = scmp.ne.s32.totalorder %s68, %s69
    %p81 = scmp.eq.s32.totalorder %s17, 1
    %p82 = por %p80, %p81
    %p84 = scmp.ne.s32.totalorder %s69, %s83
    %p85 = scmp.eq.s32.totalorder %s17, 0
    %p86 = por %p84, %p85
    %s88 = sadd.s32 %s87, 1
    %p91 = scmp.eq.s32.totalorder %s11, 1
    %p92 = scmp.ne.s32.totalorder %s87, %s89
    %p93 = scmp.eq.s32.totalorder %s11, 0
    %p94 = por %p92, %p93
    %p95 = scmp.ne.s32.totalorder %s87, %s89
    %p96 = scmp.eq.s32.totalorder %s16, 1
    %p97 = por %p95, %p96
    %p98 = scmp.ne.s32.totalorder %s89, %s90
    %p99 = scmp.eq.s32.totalorder %s16, 0
    %p100 = por %p98, %p99
    %p101 = scmp.ne.s32.totalorder %s89, %s90
    %p102 = scmp.eq.s32.totalorder %s17, 1
    %p103 = por %p101, %p102
    %p105 = scmp.ne.s32.totalorder %s90, %s104
    %p106 = scmp.eq.s32.totalorder %s17, 0
    %p107 = por %p105, %p106
    %s109 = sadd.s32 %s108, 1
    %p112 = scmp.eq.s32.totalorder %s11, 1
    %p113 = scmp.ne.s32.totalorder %s108, %s110
    %p114 = scmp.eq.s32.totalorder %s11, 0
    %p115 = por %p113, %p114
    %p116 = scmp.ne.s32.totalorder %s108, %s110
    %p117 = scmp.eq.s32.totalorder %s16, 1
    %p118 = por %p116, %p117
    %p119 = scmp.ne.s32.totalorder %s110, %s111
    %p120 = scmp.eq.s32.totalorder %s16, 0
    %p121 = por %p119, %p120
    %p122 = scmp.ne.s32.totalorder %s110, %s111
    %p123 = scmp.eq.s32.totalorder %s17, 1
    %p124 = por %p122, %p123
    %p126 = scmp.ne.s32.totalorder %s111, %s125
    %p127 = scmp.eq.s32.totalorder %s17, 0
    %p128 = por %p126, %p127
    %s129 = ssub.s32 %s11, %s18
    %p130 = scmp.eq.s32.totalorder %s129, 0
    %s132 = sadd.s32 %s131, 1
    %s133 = scalar_select %p130, %s131, %s132
    %p136 = pneg %p130
    %p137 = scmp.eq.s32.totalorder %s11, 1
    %p138 = por %p136, %p137
    %p139 = scmp.ne.s32.totalorder %s131, %s134
    %p140 = scmp.eq.s32.totalorder %s11, 0
    %p141 = por %p139, %p140
    %p142 = scmp.ne.s32.totalorder %s131, %s134
    %p143 = scmp.eq.s32.totalorder %s16, 1
    %p144 = por %p142, %p143
    %p145 = scmp.ne.s32.totalorder %s134, %s135
    %p146 = scmp.eq.s32.totalorder %s16, 0
    %p147 = por %p145, %p146
    %p148 = scmp.ne.s32.totalorder %s134, %s135
    %p149 = scmp.eq.s32.totalorder %s17, 1
    %p150 = por %p148, %p149
    %p152 = scmp.ne.s32.totalorder %s135, %s151
    %p153 = scmp.eq.s32.totalorder %s17, 0
    %p154 = por %p152, %p153
    %p155 = scmp.le.s32.totalorder 1, %s11
    %p156 = scmp.lt.s32.totalorder %s11, 3
    %p157 = pnand %p155, %p156
    %p158 = pneg %p157
    // Predicated region
    $region9: #{generator_block.1} parent=5 // pred_check
      _
    $region10: #{generator_block.1} parent=5 // pred_check_branch
      %160 = sbr.rel (%p157) target = $region12
    $region11: #{generator_block.1} parent=5 // pred_region
      %s161 = ssub.s32 %s11, 1
      // Predicated region
      $region13: #{generator_block.1} parent=11 // pred_check
        %p162 = pneg %p58
      $region14: #{generator_block.1} parent=11 // pred_check_branch
        %164 = sbr.rel (%p162) target = $region16
      $region15: #{generator_block.1} parent=11 // pred_region
        _
      $region16: #{generator_block.1} parent=11 // pred_fallthru
        _
      // Predicated region
      $region17: #{generator_block.1} parent=11 // pred_check
        %p165 = pneg %p79
      $region18: #{generator_block.1} parent=11 // pred_check_branch
        %167 = sbr.rel (%p165) target = $region20
      $region19: #{generator_block.1} parent=11 // pred_region
        _
      $region20: #{generator_block.1} parent=11 // pred_fallthru
        _
      // Predicated region
      $region21: #{generator_block.1} parent=11 // pred_check
        %p168 = pneg %p100
      $region22: #{generator_block.1} parent=11 // pred_check_branch
        %170 = sbr.rel (%p168) target = $region24
      $region23: #{generator_block.1} parent=11 // pred_region
        _
      $region24: #{generator_block.1} parent=11 // pred_fallthru
        _
      // Predicated region
      $region25: #{generator_block.1} parent=11 // pred_check
        %p171 = pneg %p121
      $region26: #{generator_block.1} parent=11 // pred_check_branch
        %173 = sbr.rel (%p171) target = $region28
      $region27: #{generator_block.1} parent=11 // pred_region
        _
      $region28: #{generator_block.1} parent=11 // pred_fallthru
        _
    $region12: #{generator_block.1} parent=5 // pred_fallthru
      _
    %p174 = scmp.lt.s32.totalorder %s11, 2
    // Predicated region
    $region29: #{generator_block.1} parent=5 // pred_check
      %p175 = pneg %p174
    $region30: #{generator_block.1} parent=5 // pred_check_branch
      %177 = sbr.rel (%p175) target = $region32
    $region31: #{generator_block.1} parent=5 // pred_region
      // Predicated region
      $region33: #{generator_block.1} parent=31 // pred_check
        %p178 = pneg %p31
      $region34: #{generator_block.1} parent=31 // pred_check_branch
        %180 = sbr.rel (%p178) target = $region36
      $region35: #{generator_block.1} parent=31 // pred_region
        %p181 = scmp.lt.s32.totalorder %s11, 1
        %s182 = scalar_select %p181, %s11, 1
        %s183 = smul.addr %s182, 15
        %s184 = smul.addr %s183, 8
        %s185 = scalar_lea.vmem %s0, %s184
      $region36: #{generator_block.1} parent=31 // pred_fallthru
        _
    $region32: #{generator_block.1} parent=5 // pred_fallthru
      _
    %p186 = scmp.le.s32.totalorder 1, %s11
    %p187 = scmp.lt.s32.totalorder %s11, 3
    %p188 = pnand %p186, %p187
    %p189 = pneg %p188
    // Predicated region
    $region37: #{generator_block.1} parent=5 // pred_check
      _
    $region38: #{generator_block.1} parent=5 // pred_check_branch
      %191 = sbr.rel (%p188) target = $region40
    $region39: #{generator_block.1} parent=5 // pred_region
      %s192 = ssub.s32 %s11, 1
      %p193 = scmp.lt.s32.totalorder %s16, 1
      %s194 = scalar_select %p193, %s16, 1
      %s195 = smul.addr %s194, 15
      %s196 = smul.addr %s195, 8
      %s197 = scalar_lea.vmem %s0, %s196
      %p198 = pneg %p37
      %p199 = pneg %p34
      %p200 = pneg %p58
      %p201 = pneg %p55
      %p202 = pneg %p79
      %p203 = pneg %p76
      %p204 = pneg %p100
      %p205 = pneg %p97
      %p206 = pneg %p121
      %p207 = pneg %p118
      %p208 = pneg %p147
      %p209 = pneg %p144
      %p210 = scmp.lt.s32.totalorder %s16, 1
      %s211 = scalar_select %p210, %s16, 1
      %s212 = smul.addr %s211, 3
      %s213 = smul.addr %s212, 8
      %s214 = scalar_lea.vmem %s5, %s213
      %p215 = scmp.lt.s32.totalorder %s16, 1
      %s216 = scalar_select %p215, %s16, 1
      %s217 = smul.addr %s216, 15
      %s218 = smul.addr %s217, 8
      %s219 = scalar_lea.vmem %s0, %s218
      %p220 = scmp.lt.s32.totalorder %s16, 1
      %s221 = scalar_select %p220, %s16, 1
      %s222 = smul.addr %s221, 3
      %s223 = smul.addr %s222, 8
      %s224 = scalar_lea.vmem %s5, %s223
      %v225 = vld [vmem:[%s1] sm:$0xff]
      %v226 = vld [vmem:[%s219] sm:$0xff]
      %v227 = vld [vmem:[%s219 + $0x8] sm:$0xff]
      %v228 = vld [vmem:[%s219 + $0x10] sm:$0xff]
      %v229 = vld [vmem:[%s219 + $0x18] sm:$0xff]
      %v230 = vld [vmem:[%s219 + $0x20] sm:$0xff]
      %v231 = vld [vmem:[%s219 + $0x28] sm:$0xff]
      %v232 = vld [vmem:[%s219 + $0x30] sm:$0xff]
      %v233 = vld [vmem:[%s219 + $0x38] sm:$0xff]
      %v234 = vld [vmem:[%s219 + $0x40] sm:$0xff]
      %v235 = vld [vmem:[%s219 + $0x48] sm:$0xff]
      %v236 = vld [vmem:[%s219 + $0x50] sm:$0xff]
      %v237 = vld [vmem:[%s219 + $0x58] sm:$0xff]
      %v238 = vld [vmem:[%s219 + $0x60] sm:$0xf]
      %v239 = vld [vmem:[%s219 + $0x68] sm:$0xf]
      %v240 = vld [vmem:[%s219 + $0x70] sm:$0xf]
      %v241 = vld [vmem:[%s2] sm:$0xff]
      %243 = vset.pattern.permute.xlu0 0
      %244 = vperm.xlu0 %243, %v241
      %v245 = vpop.permute.xlu0 %244
      %vm247 = vcmask 293888
      %v249 = vsel %vm247, %v225, 0
      %vm251 = vcmask 1043456
      %v253 = vsel %vm251, %v238, 0
      %v256 = vsel %vm251, %v239, 0
      %v259 = vsel %vm251, %v240, 0
      %261 = vmatprep.subr.mxu0 %v227
      %262 = vmatpush1.msra.mxu0 %v226
      %263 = vmatprep.subr.mxu0 %v230
      %264 = vmatpush1.msra.mxu0 %v229
      %265 = vmatprep.subr.mxu0 %v233
      %266 = vmatpush1.msra.mxu0 %v232
      %267 = vmatprep.subr.mxu0 %v236
      %268 = vmatpush1.msra.mxu0 %v235
      %269 = vmatprep.subr.mxu0 %v256
      %270 = vmatpush1.msra.mxu0 %v253
      %271 = vmatprep.subr.mxu0 0.0
      %272 = vmatpush1.msra.mxu0 0.0
      %273 = vmatprep.subr.mxu0 0.0
      %274 = vmatpush1.msra.mxu0 0.0
      %275 = vmatprep.subr.mxu0 0.0
      %276 = vmatpush1.msra.mxu0 0.0
      %277 = vmatprep.subr.mxu0 0.0
      %278 = vmatpush1.msra.mxu0 0.0
      %279 = vmatprep.subr.mxu0 0.0
      %280 = vmatpush1.msra.mxu0 0.0
      %281 = vmatprep.subr.mxu0 0.0
      %282 = vmatpush1.msra.mxu0 0.0
      %283 = vmatprep.subr.mxu0 0.0
      %284 = vmatpush1.msra.mxu0 0.0
      %285 = vmatprep.subr.mxu0 0.0
      %286 = vmatpush1.msra.mxu0 0.0
      %287 = vmatprep.subr.mxu0 0.0
      %288 = vmatpush1.msra.mxu0 0.0
      %289 = vmatprep.subr.mxu0 0.0
      %290 = vmatpush1.msra.mxu0 0.0
      %291 = vmatprep.subr.mxu0 0.0
      %292 = vmatpush1.msra.mxu0 0.0
      %293 = vmatprep.subr.mxu0 0.0
      %294 = vmatpush1.msra.mxu0 0.0
      %295 = vmatprep.subr.mxu0 0.0
      %296 = vmatpush1.msra.mxu0 0.0
      %297 = vmatprep.subr.mxu0 0.0
      %298 = vmatpush1.msra.mxu0 0.0
      %299 = vmatprep.subr.mxu0 0.0
      %300 = vmatpush1.msra.mxu0 0.0
      %301 = vmatprep.subr.mxu0 0.0
      %302 = vmatpush1.msra.mxu0 0.0
      %303 = vmatprep.subr.mxu0 0.0
      %304 = vmatpush1.msra.mxu0 0.0
      %305 = vmatprep.subr.mxu0 0.0
      %306 = vmatpush1.msra.mxu0 0.0
      %307 = vmatprep.subr.mxu0 0.0
      %308 = vmatpush1.msra.mxu0 0.0
      %309 = vmatprep.subr.mxu0 0.0
      %310 = vmatpush1.msra.mxu0 0.0
      %311 = vmatprep.subr.mxu0 0.0
      %312 = vmatpush1.msra.mxu0 0.0
      %313 = vmatprep.subr.mxu0 0.0
      %314 = vmatpush1.msra.mxu0 0.0
      %315 = vmatprep.subr.mxu0 0.0
      %316 = vmatpush1.msra.mxu0 0.0
      %317 = vmatprep.subr.mxu0 0.0
      %318 = vmatpush1.msra.mxu0 0.0
      %319 = vmatprep.subr.mxu0 0.0
      %320 = vmatpush1.msra.mxu0 0.0
      %321 = vmatprep.subr.mxu0 0.0
      %322 = vmatpush1.msra.mxu0 0.0
      %323 = vmatprep.subr.mxu0 0.0
      %324 = vmatpush1.msra.mxu0 0.0
      %325 = vmatprep.mubr.f32.mxu0 0.0
      %326 = vmatmul.mubr.f32.gmra.mrb[0].mxu0 %v249
      %v327 = vpop.f32.mrb[0].mxu0
      %v328 = vadd.f32 %v245, %v327
      %v329 = vpop.f32.mrb[0].mxu0
      %v330 = vadd.f32 %v245, %v329
      %331 = vdwg.mxu0
      %332 = vmatprep.subr.mxu0 0.0
      %333 = vmatpush1.msra.mxu0 %v228
      %334 = vmatprep.subr.mxu0 0.0
      %335 = vmatpush1.msra.mxu0 %v231
      %336 = vmatprep.subr.mxu0 0.0
      %337 = vmatpush1.msra.mxu0 %v234
      %338 = vmatprep.subr.mxu0 0.0
      %339 = vmatpush1.msra.mxu0 %v237
      %340 = vmatprep.subr.mxu0 0.0
      %341 = vmatpush1.msra.mxu0 %v259
      %342 = vmatprep.subr.mxu0 0.0
      %343 = vmatpush1.msra.mxu0 0.0
      %344 = vmatprep.subr.mxu0 0.0
      %345 = vmatpush1.msra.mxu0 0.0
      %346 = vmatprep.subr.mxu0 0.0
      %347 = vmatpush1.msra.mxu0 0.0
      %348 = vmatprep.subr.mxu0 0.0
      %349 = vmatpush1.msra.mxu0 0.0
      %350 = vmatprep.subr.mxu0 0.0
      %351 = vmatpush1.msra.mxu0 0.0
      %352 = vmatprep.subr.mxu0 0.0
      %353 = vmatpush1.msra.mxu0 0.0
      %354 = vmatprep.subr.mxu0 0.0
      %355 = vmatpush1.msra.mxu0 0.0
      %356 = vmatprep.subr.mxu0 0.0
      %357 = vmatpush1.msra.mxu0 0.0
      %358 = vmatprep.subr.mxu0 0.0
      %359 = vmatpush1.msra.mxu0 0.0
      %360 = vmatprep.subr.mxu0 0.0
      %361 = vmatpush1.msra.mxu0 0.0
      %362 = vmatprep.subr.mxu0 0.0
      %363 = vmatpush1.msra.mxu0 0.0
      %364 = vmatprep.subr.mxu0 0.0
      %365 = vmatpush1.msra.mxu0 0.0
      %366 = vmatprep.subr.mxu0 0.0
      %367 = vmatpush1.msra.mxu0 0.0
      %368 = vmatprep.subr.mxu0 0.0
      %369 = vmatpush1.msra.mxu0 0.0
      %370 = vmatprep.subr.mxu0 0.0
      %371 = vmatpush1.msra.mxu0 0.0
      %372 = vmatprep.subr.mxu0 0.0
      %373 = vmatpush1.msra.mxu0 0.0
      %374 = vmatprep.subr.mxu0 0.0
      %375 = vmatpush1.msra.mxu0 0.0
      %376 = vmatprep.subr.mxu0 0.0
      %377 = vmatpush1.msra.mxu0 0.0
      %378 = vmatprep.subr.mxu0 0.0
      %379 = vmatpush1.msra.mxu0 0.0
      %380 = vmatprep.subr.mxu0 0.0
      %381 = vmatpush1.msra.mxu0 0.0
      %382 = vmatprep.subr.mxu0 0.0
      %383 = vmatpush1.msra.mxu0 0.0
      %384 = vmatprep.subr.mxu0 0.0
      %385 = vmatpush1.msra.mxu0 0.0
      %386 = vmatprep.subr.mxu0 0.0
      %387 = vmatpush1.msra.mxu0 0.0
      %388 = vmatprep.subr.mxu0 0.0
      %389 = vmatpush1.msra.mxu0 0.0
      %390 = vmatprep.subr.mxu0 0.0
      %391 = vmatpush1.msra.mxu0 0.0
      %392 = vmatprep.subr.mxu0 0.0
      %393 = vmatpush1.msra.mxu0 0.0
      %394 = vmatprep.subr.mxu0 0.0
      %395 = vmatpush1.msra.mxu0 0.0
      %396 = vmatprep.mubr.f32.mxu0 0.0
      %397 = vmatmul.mubr.f32.gmra.mrb[0].mxu0 %v249
      %v398 = vpop.f32.mrb[0].mxu0
      %v399 = vadd.f32 %v245, %v398
      %v400 = vpop.f32.mrb[0].mxu0
      %401 = vdwg.mxu0
      %vm402 = vcmp.gt.f32.partialorder %v328, 0.0
      %vm403 = vcmp.gt.f32.partialorder %v330, 0.0
      %vm404 = vcmp.gt.f32.partialorder %v399, 0.0
      %v405 = vmul.f32 %v328, 0.01
      %v406 = vmul.f32 %v330, 0.01
      %v407 = vmul.f32 %v399, 0.01
      %v408 = vsel %vm402, %v328, %v405
      %v409 = vsel %vm403, %v330, %v406
      %v410 = vsel %vm404, %v399, %v407
      %v411 = vlaneseq
      %v412 = vand.u32 %v411, 127
      %v413 = vadd.s32 %v412, 128
      %v414 = vadd.s32 %v412, 256
      %vm415 = vcmp.lt.s32.totalorder %v412, 0
      %v416 = vsub.s32 0, %v412
      %v417 = vsel %vm415, %v416, %v412
      %v418 = vmul.u32.u64.compose %v417, 3817748708
      %v419 = vextract.low.u32 %v418
      %v420 = vextract.high.u32 %v418
      %v421 = vshrl.u32 %v420, 4
      %v422 = vmul.u32 %v421, 18
      %v423 = vsub.s32 %v417, %v422
      %v424 = vsub.s32 0, %v423
      %v425 = vsel %vm415, %v424, %v423
      %vm426 = vcmp.lt.s32.totalorder %v413, 0
      %v427 = vsub.s32 0, %v413
      %v428 = vsel %vm426, %v427, %v413
      %v429 = vmul.u32.u64.compose %v428, 3817748708
      %v430 = vextract.low.u32 %v429
      %v431 = vextract.high.u32 %v429
      %v432 = vshrl.u32 %v431, 4
      %v433 = vmul.u32 %v432, 18
      %v434 = vsub.s32 %v428, %v433
      %v435 = vsub.s32 0, %v434
      %v436 = vsel %vm426, %v435, %v434
      %vm437 = vcmp.lt.s32.totalorder %v414, 0
      %v438 = vsub.s32 0, %v414
      %v439 = vsel %vm437, %v438, %v414
      %v440 = vmul.u32.u64.compose %v439, 3817748708
      %v441 = vextract.low.u32 %v440
      %v442 = vextract.high.u32 %v440
      %v443 = vshrl.u32 %v442, 4
      %v444 = vmul.u32 %v443, 18
      %v445 = vsub.s32 %v439, %v444
      %v446 = vsub.s32 0, %v445
      %v447 = vsel %vm437, %v446, %v445
      %vm448 = vcmp.ne.s32.totalorder %v425, 0
      %vm449 = vcmp.ne.s32.totalorder %v436, 0
      %vm450 = vcmp.ne.s32.totalorder %v447, 0
      %vm451 = vcmp.lt.s32.totalorder %v425, 0
      %vm452 = vcmp.lt.s32.totalorder %v436, 0
      %vm453 = vcmp.lt.s32.totalorder %v447, 0
      %vm454 = vmand %vm451, %vm448
      %vm455 = vmand %vm452, %vm449
      %vm456 = vmand %vm453, %vm450
      %v457 = vadd.s32 %v425, 18
      %v458 = vadd.s32 %v436, 18
      %v459 = vadd.s32 %v447, 18
      %v460 = vsel %vm454, %v457, %v425
      %v461 = vsel %vm455, %v458, %v436
      %v462 = vsel %vm456, %v459, %v447
      %vm463 = vcmp.lt.s32.totalorder %v460, 16
      %vm464 = vcmp.lt.s32.totalorder %v461, 16
      %vm465 = vcmp.lt.s32.totalorder %v462, 16
      %v466 = vsel %vm463, 1, 0
      %v467 = vsel %vm464, 1, 0
      %v468 = vsel %vm465, 1, 0
      %vm469 = vcmp.eq.s32.totalorder %v466, 1
      %vm470 = vcmp.eq.s32.totalorder %v467, 1
      %vm471 = vcmp.eq.s32.totalorder %v468, 1
      %v472 = vsel %vm469, %v408, 0.0
      %v473 = vsel %vm470, %v409, 0.0
      %v474 = vsel %vm471, %v410, 0.0
      %vm475 = vcmask 154624
      %476 = vst.msk [vmem:[#allocation2] sm:$0xff] %vm475, 0.0
      %477 = vst.msk [vmem:[#allocation2 + $0x18] sm:$0xff] %vm475, 0.0
      %478 = vst.msk [vmem:[#allocation2 + $0x30] sm:$0xff] %vm475, 0.0
      %vm479 = vcmask 556424
      %480 = vst.msk [vmem:[#allocation2 + $0x10] sm:$0xff] %vm479, 0.0
      %481 = vst.msk [vmem:[#allocation2 + $0x28] sm:$0xff] %vm479, 0.0
      %482 = vst.msk [vmem:[#allocation2 + $0x40] sm:$0xff] %vm479, 0.0
      %486 = vrot.lane.b32.xlu0 %v472, 19
      %v487 = vpop.permute.xlu0 %486
      %488 = vrot.lane.b32.xlu0 %v473, 19
      %v489 = vpop.permute.xlu0 %488
      %490 = vrot.lane.b32.xlu0 %v474, 19
      %v491 = vpop.permute.xlu0 %490
      %v492 = vsel %vm475, %v487, %v489
      %v493 = vsel %vm475, %v489, %v491
      %vm497 = vcmask 1047704
      %498 = vst.msk [vmem:[#allocation2] sm:$0xff] %vm497, %v487
      %499 = vst [vmem:[#allocation2 + $0x8] sm:$0xff] %v492
      %vm500 = vcmask 416768
      %501 = vst.msk [vmem:[#allocation2 + $0x10] sm:$0xff] %vm500, %v493
      %502 = vrot.lane.b32.xlu0 %v472, 18
      %v503 = vpop.permute.xlu0 %502
      %504 = vrot.lane.b32.xlu0 %v473, 18
      %v505 = vpop.permute.xlu0 %504
      %506 = vrot.lane.b32.xlu0 %v474, 18
      %v507 = vpop.permute.xlu0 %506
      %vm508 = vcmask 146432
      %v509 = vsel %vm508, %v503, %v505
      %v510 = vsel %vm508, %v505, %v507
      %vm514 = vcmask 1047696
      %515 = vst.msk [vmem:[#allocation2 + $0x18] sm:$0xff] %vm514, %v503
      %516 = vst [vmem:[#allocation2 + $0x20] sm:$0xff] %v509
      %vm517 = vcmask 408576
      %518 = vst.msk [vmem:[#allocation2 + $0x28] sm:$0xff] %vm517, %v510
      %519 = vrot.lane.b32.xlu0 %v472, 17
      %v520 = vpop.permute.xlu0 %519
      %521 = vrot.lane.b32.xlu0 %v473, 17
      %v522 = vpop.permute.xlu0 %521
      %523 = vrot.lane.b32.xlu0 %v474, 17
      %v524 = vpop.permute.xlu0 %523
      %vm525 = vcmask 138240
      %v526 = vsel %vm525, %v520, %v522
      %v527 = vsel %vm525, %v522, %v524
      %vm531 = vcmask 1047688
      %532 = vst.msk [vmem:[#allocation2 + $0x30] sm:$0xff] %vm531, %v520
      %533 = vst [vmem:[#allocation2 + $0x38] sm:$0xff] %v526
      %vm534 = vcmask 400384
      %535 = vst.msk [vmem:[#allocation2 + $0x40] sm:$0xff] %vm534, %v527
      %v536 = vld [vmem:[#allocation2] sm:$0xff]
      %v537 = vld [vmem:[#allocation2 + $0x8] sm:$0xff]
      %v538 = vld [vmem:[#allocation2 + $0x10] sm:$0xff]
      %v539 = vld [vmem:[#allocation2 + $0x18] sm:$0xff]
      %v540 = vld [vmem:[#allocation2 + $0x20] sm:$0xff]
      %v541 = vld [vmem:[#allocation2 + $0x28] sm:$0xff]
      %v542 = vld [vmem:[#allocation2 + $0x30] sm:$0xff]
      %v543 = vld [vmem:[#allocation2 + $0x38] sm:$0xff]
      %v544 = vld [vmem:[#allocation2 + $0x40] sm:$0xff]
      %554 = vrot.lane.b32.xlu0 %v536, 110
      %v555 = vpop.permute.xlu0 %554
      %556 = vrot.lane.b32.xlu0 %v537, 110
      %v557 = vpop.permute.xlu0 %556
      %558 = vrot.lane.b32.xlu0 %v538, 110
      %v559 = vpop.permute.xlu0 %558
      %560 = vrot.lane.b32.xlu0 %v539, 110
      %v561 = vpop.permute.xlu0 %560
      %562 = vrot.lane.b32.xlu0 %v540, 110
      %v563 = vpop.permute.xlu0 %562
      %564 = vrot.lane.b32.xlu0 %v541, 110
      %v565 = vpop.permute.xlu0 %564
      %566 = vrot.lane.b32.xlu0 %v542, 110
      %v567 = vpop.permute.xlu0 %566
      %568 = vrot.lane.b32.xlu0 %v543, 110
      %v569 = vpop.permute.xlu0 %568
      %570 = vrot.lane.b32.xlu0 %v544, 110
      %v571 = vpop.permute.xlu0 %570
      %vm572 = vcmask 900096
      %v573 = vsel %vm572, %v555, %v557
      %v574 = vsel %vm572, %v557, %v559
      %v575 = vsel %vm572, %v561, %v563
      %v576 = vsel %vm572, %v563, %v565
      %v577 = vsel %vm572, %v567, %v569
      %v578 = vsel %vm572, %v569, %v571
      %588 = vrot.lane.b32.xlu0 %v536, 92
      %v589 = vpop.permute.xlu0 %588
      %590 = vrot.lane.b32.xlu0 %v537, 92
      %v591 = vpop.permute.xlu0 %590
      %592 = vrot.lane.b32.xlu0 %v538, 92
      %v593 = vpop.permute.xlu0 %592
      %594 = vrot.lane.b32.xlu0 %v539, 92
      %v595 = vpop.permute.xlu0 %594
      %596 = vrot.lane.b32.xlu0 %v540, 92
      %v597 = vpop.permute.xlu0 %596
      %598 = vrot.lane.b32.xlu0 %v541, 92
      %v599 = vpop.permute.xlu0 %598
      %600 = vrot.lane.b32.xlu0 %v542, 92
      %v601 = vpop.permute.xlu0 %600
      %602 = vrot.lane.b32.xlu0 %v543, 92
      %v603 = vpop.permute.xlu0 %602
      %604 = vrot.lane.b32.xlu0 %v544, 92
      %v605 = vpop.permute.xlu0 %604
      %vm606 = vcmask 752640
      %v607 = vsel %vm606, %v589, %v591
      %v608 = vsel %vm606, %v591, %v593
      %v609 = vsel %vm606, %v595, %v597
      %v610 = vsel %vm606, %v597, %v599
      %v611 = vsel %vm606, %v601, %v603
      %v612 = vsel %vm606, %v603, %v605
      %v622 = vld [vmem:[%s3] sm:$0xff]
      %v623 = vld [vmem:[%s4] sm:$0xff]
      %625 = vset.pattern.permute.xlu0 0
      %626 = vperm.xlu0 %625, %v623
      %v627 = vpop.permute.xlu0 %626
      %vm629 = vcmask 588800
      %v631 = vsel %vm629, %v622, 0
      %633 = vmatprep.subr.mxu0 %v537
      %634 = vmatpush1.msra.mxu0 %v536
      %635 = vmatprep.subr.mxu0 %v540
      %636 = vmatpush1.msra.mxu0 %v539
      %637 = vmatprep.subr.mxu0 %v543
      %638 = vmatpush1.msra.mxu0 %v542
      %639 = vmatprep.subr.mxu0 %v574
      %640 = vmatpush1.msra.mxu0 %v573
      %641 = vmatprep.subr.mxu0 %v576
      %642 = vmatpush1.msra.mxu0 %v575
      %643 = vmatprep.subr.mxu0 %v578
      %644 = vmatpush1.msra.mxu0 %v577
      %645 = vmatprep.subr.mxu0 %v608
      %646 = vmatpush1.msra.mxu0 %v607
      %647 = vmatprep.subr.mxu0 %v610
      %648 = vmatpush1.msra.mxu0 %v609
      %649 = vmatprep.subr.mxu0 %v612
      %650 = vmatpush1.msra.mxu0 %v611
      %651 = vmatprep.subr.mxu0 0.0
      %652 = vmatpush1.msra.mxu0 0.0
      %653 = vmatprep.subr.mxu0 0.0
      %654 = vmatpush1.msra.mxu0 0.0
      %655 = vmatprep.subr.mxu0 0.0
      %656 = vmatpush1.msra.mxu0 0.0
      %657 = vmatprep.subr.mxu0 0.0
      %658 = vmatpush1.msra.mxu0 0.0
      %659 = vmatprep.subr.mxu0 0.0
      %660 = vmatpush1.msra.mxu0 0.0
      %661 = vmatprep.subr.mxu0 0.0
      %662 = vmatpush1.msra.mxu0 0.0
      %663 = vmatprep.subr.mxu0 0.0
      %664 = vmatpush1.msra.mxu0 0.0
      %665 = vmatprep.subr.mxu0 0.0
      %666 = vmatpush1.msra.mxu0 0.0
      %667 = vmatprep.subr.mxu0 0.0
      %668 = vmatpush1.msra.mxu0 0.0
      %669 = vmatprep.subr.mxu0 0.0
      %670 = vmatpush1.msra.mxu0 0.0
      %671 = vmatprep.subr.mxu0 0.0
      %672 = vmatpush1.msra.mxu0 0.0
      %673 = vmatprep.subr.mxu0 0.0
      %674 = vmatpush1.msra.mxu0 0.0
      %675 = vmatprep.subr.mxu0 0.0
      %676 = vmatpush1.msra.mxu0 0.0
      %677 = vmatprep.subr.mxu0 0.0
      %678 = vmatpush1.msra.mxu0 0.0
      %679 = vmatprep.subr.mxu0 0.0
      %680 = vmatpush1.msra.mxu0 0.0
      %681 = vmatprep.subr.mxu0 0.0
      %682 = vmatpush1.msra.mxu0 0.0
      %683 = vmatprep.subr.mxu0 0.0
      %684 = vmatpush1.msra.mxu0 0.0
      %685 = vmatprep.subr.mxu0 0.0
      %686 = vmatpush1.msra.mxu0 0.0
      %687 = vmatprep.subr.mxu0 0.0
      %688 = vmatpush1.msra.mxu0 0.0
      %689 = vmatprep.subr.mxu0 0.0
      %690 = vmatpush1.msra.mxu0 0.0
      %691 = vmatprep.subr.mxu0 0.0
      %692 = vmatpush1.msra.mxu0 0.0
      %693 = vmatprep.subr.mxu0 0.0
      %694 = vmatpush1.msra.mxu0 0.0
      %695 = vmatprep.subr.mxu0 0.0
      %696 = vmatpush1.msra.mxu0 0.0
      %697 = vmatprep.mubr.f32.mxu0 0.0
      %698 = vmatmul.mubr.f32.gmra.mrb[0].mxu0 %v631
      %v699 = vpop.f32.mrb[0].mxu0
      %v700 = vadd.f32 %v627, %v699
      %v701 = vpop.f32.mrb[0].mxu0
      %v702 = vadd.f32 %v627, %v701
      %703 = vdwg.mxu0
      %704 = vmatprep.subr.mxu0 0.0
      %705 = vmatpush1.msra.mxu0 %v538
      %706 = vmatprep.subr.mxu0 0.0
      %707 = vmatpush1.msra.mxu0 %v541
      %708 = vmatprep.subr.mxu0 0.0
      %709 = vmatpush1.msra.mxu0 %v544
      %710 = vmatprep.subr.mxu0 0.0
      %711 = vmatpush1.msra.mxu0 %v559
      %712 = vmatprep.subr.mxu0 0.0
      %713 = vmatpush1.msra.mxu0 %v565
      %714 = vmatprep.subr.mxu0 0.0
      %715 = vmatpush1.msra.mxu0 %v571
      %716 = vmatprep.subr.mxu0 0.0
      %717 = vmatpush1.msra.mxu0 %v593
      %718 = vmatprep.subr.mxu0 0.0
      %719 = vmatpush1.msra.mxu0 %v599
      %720 = vmatprep.subr.mxu0 0.0
      %721 = vmatpush1.msra.mxu0 %v605
      %722 = vmatprep.subr.mxu0 0.0
      %723 = vmatpush1.msra.mxu0 0.0
      %724 = vmatprep.subr.mxu0 0.0
      %725 = vmatpush1.msra.mxu0 0.0
      %726 = vmatprep.subr.mxu0 0.0
      %727 = vmatpush1.msra.mxu0 0.0
      %728 = vmatprep.subr.mxu0 0.0
      %729 = vmatpush1.msra.mxu0 0.0
      %730 = vmatprep.subr.mxu0 0.0
      %731 = vmatpush1.msra.mxu0 0.0
      %732 = vmatprep.subr.mxu0 0.0
      %733 = vmatpush1.msra.mxu0 0.0
      %734 = vmatprep.subr.mxu0 0.0
      %735 = vmatpush1.msra.mxu0 0.0
      %736 = vmatprep.subr.mxu0 0.0
      %737 = vmatpush1.msra.mxu0 0.0
      %738 = vmatprep.subr.mxu0 0.0
      %739 = vmatpush1.msra.mxu0 0.0
      %740 = vmatprep.subr.mxu0 0.0
      %741 = vmatpush1.msra.mxu0 0.0
      %742 = vmatprep.subr.mxu0 0.0
      %743 = vmatpush1.msra.mxu0 0.0
      %744 = vmatprep.subr.mxu0 0.0
      %745 = vmatpush1.msra.mxu0 0.0
      %746 = vmatprep.subr.mxu0 0.0
      %747 = vmatpush1.msra.mxu0 0.0
      %748 = vmatprep.subr.mxu0 0.0
      %749 = vmatpush1.msra.mxu0 0.0
      %750 = vmatprep.subr.mxu0 0.0
      %751 = vmatpush1.msra.mxu0 0.0
      %752 = vmatprep.subr.mxu0 0.0
      %753 = vmatpush1.msra.mxu0 0.0
      %754 = vmatprep.subr.mxu0 0.0
      %755 = vmatpush1.msra.mxu0 0.0
      %756 = vmatprep.subr.mxu0 0.0
      %757 = vmatpush1.msra.mxu0 0.0
      %758 = vmatprep.subr.mxu0 0.0
      %759 = vmatpush1.msra.mxu0 0.0
      %760 = vmatprep.subr.mxu0 0.0
      %761 = vmatpush1.msra.mxu0 0.0
      %762 = vmatprep.subr.mxu0 0.0
      %763 = vmatpush1.msra.mxu0 0.0
      %764 = vmatprep.subr.mxu0 0.0
      %765 = vmatpush1.msra.mxu0 0.0
      %766 = vmatprep.subr.mxu0 0.0
      %767 = vmatpush1.msra.mxu0 0.0
      %768 = vmatprep.mubr.f32.mxu0 0.0
      %769 = vmatmul.mubr.f32.gmra.mrb[0].mxu0 %v631
      %v770 = vpop.f32.mrb[0].mxu0
      %v771 = vadd.f32 %v627, %v770
      %v772 = vpop.f32.mrb[0].mxu0
      %773 = vdwg.mxu0
      %vm774 = vcmp.gt.f32.partialorder %v700, 0.0
      %vm775 = vcmp.gt.f32.partialorder %v702, 0.0
      %vm776 = vcmp.gt.f32.partialorder %v771, 0.0
      %v777 = vmul.f32 %v700, 0.01
      %v778 = vmul.f32 %v702, 0.01
      %v779 = vmul.f32 %v771, 0.01
      %v780 = vsel %vm774, %v700, %v777
      %v781 = vsel %vm775, %v702, %v778
      %v782 = vsel %vm776, %v771, %v779
      %783 = vst [vmem:[%s224] sm:$0xff] %v780
      %784 = vst [vmem:[%s224 + $0x8] sm:$0xff] %v781
      %vm785 = vcmask 261120
      %786 = vst.msk [vmem:[%s224 + $0x10] sm:$0xff] %vm785, %v782
      %p787 = scmp.lt.s32.totalorder %s16, 1
      %s788 = scalar_select %p787, %s16, 1
      %s789 = smul.addr %s788, 3
      %s790 = smul.addr %s789, 8
      %s791 = scalar_lea.vmem %s5, %s790
      // Predicated region
      $region41: #{generator_block.1} parent=39 // pred_check
        %p792 = pneg %p144
      $region42: #{generator_block.1} parent=39 // pred_check_branch
        %794 = sbr.rel (%p792) target = $region44
      $region43: #{generator_block.1} parent=39 // pred_region
        _
      $region44: #{generator_block.1} parent=39 // pred_fallthru
        _
    $region40: #{generator_block.1} parent=5 // pred_fallthru
      _
    %p795 = scmp.le.s32.totalorder 2, %s11
    // Predicated region
    $region45: #{generator_block.1} parent=5 // pred_check
      %p796 = pneg %p795
    $region46: #{generator_block.1} parent=5 // pred_check_branch
      %798 = sbr.rel (%p796) target = $region48
    $region47: #{generator_block.1} parent=5 // pred_region
      %s799 = ssub.s32 %s11, 2
      // Predicated region
      $region49: #{generator_block.1} parent=47 // pred_check
        %p800 = pneg %p150
      $region50: #{generator_block.1} parent=47 // pred_check_branch
        %802 = sbr.rel (%p800) target = $region52
      $region51: #{generator_block.1} parent=47 // pred_region
        %p803 = scmp.lt.s32.totalorder %s17, 1
        %s804 = scalar_select %p803, %s17, 1
        %s805 = smul.addr %s804, 3
        %s806 = smul.addr %s805, 8
        %s807 = scalar_lea.vmem %s5, %s806
      $region52: #{generator_block.1} parent=47 // pred_fallthru
        _
    $region48: #{generator_block.1} parent=5 // pred_fallthru
      _
  $region6: #{generator_block.1} parent=0 // loop_footer
    %s15 = sadd.s32 1, %s11
  $region7: #{generator_block.1} parent=0 // loop_footer_branch
    %10 = sbr.rel target = $region3
  $region8: #{generator_block.1} parent=0 // loop_exit
    _

</llo_original>
